<compile_context>
chip_gen: v5e
topology: v5e:2x2
jax: 0.10.0
libtpu: 0.0.40
codegen_flags: <defaults>
</compile_context>

<pallas_src>
import functools

import numpy as np
import jax
import jax.numpy as jnp
from jax import lax
from jax.experimental import pallas as pl
from jax.experimental.pallas import tpu as pltpu


def _round_up(x, m):
    return (x + m - 1) // m * m


# ------------------------------ fused Pallas kernel ------------------------------

def _up_doubleconv_kernel(x1_ref, x2_ref, ah_ref, b1_ref, b2_ref,
                          bias1_ref, bias2_ref, o_ref, inpad, midpad,
                          *, C1, C2, Cmid, Cout, H2, W2, Hup, W1, top, kpad2):
    Ho, Wo = H2, W2

    # ---- in-VMEM halo: zero the padded, lane-flattened scratch buffers ----
    inpad[...] = jnp.zeros_like(inpad)
    midpad[...] = jnp.zeros_like(midpad)

    # ---- bilinear upsample of x1 (align_corners=True): row (H) interpolation only.
    #      Column (W) interpolation + F.pad placement are folded into b1.  ----
    t = jnp.dot(ah_ref[...], x1_ref[0], preferred_element_type=jnp.float32)   # (Hup, W1*C1)

    # ---- place skip (x2) and row-interp x1 side by side in the padded buffer ----
    inpad[1:1 + H2, C2:(W2 + 1) * C2] = x2_ref[0]
    inpad[1 + top:1 + top + Hup, kpad2:kpad2 + W1 * C1] = t

    # ---- conv1 (3x3, BN + W-interp folded) + bias + ReLU: 3 ky-matmuls ----
    acc1 = jnp.zeros((Ho, Wo * Cmid), jnp.float32)
    for ky in range(3):
        acc1 += jnp.dot(inpad[ky:ky + Ho, :], b1_ref[ky],
                        preferred_element_type=jnp.float32)
    mid = jnp.maximum(acc1 + bias1_ref[...], 0.0)
    midpad[1:1 + Ho, Cmid:(Wo + 1) * Cmid] = mid

    # ---- conv2 (3x3, BN folded) + bias + ReLU: lane-dense (Ho, Wo*Cout) output ----
    acc2 = jnp.zeros((Ho, Wo * Cout), jnp.float32)
    for ky in range(3):
        acc2 += jnp.dot(midpad[ky:ky + Ho, :], b2_ref[ky],
                        preferred_element_type=jnp.float32)
    o_ref[0] = jnp.maximum(acc2 + bias2_ref[...], 0.0)


# ------------------------------ wrapper helpers ------------------------------

def _interp_matrix(n_in, n_out):
    """Bilinear (align_corners=True) interpolation matrix, shape (n_out, n_in)."""
    a = np.zeros((n_out, n_in), np.float32)
    if n_in == 1 or n_out == 1:
        a[:, 0] = 1.0
        return a
    src = np.arange(n_out, dtype=np.float64) * (n_in - 1) / (n_out - 1)
    i0 = np.clip(np.floor(src).astype(np.int64), 0, n_in - 1)
    i1 = np.minimum(i0 + 1, n_in - 1)
    f = (src - i0).astype(np.float32)
    a[np.arange(n_out), i0] += (1.0 - f)
    a[np.arange(n_out), i1] += f
    return a


def _banded_conv_weights(w, bn_scale, w_out):
    """Block-banded 3x3-conv weights for the lane-flattened (W*C) layout.

    w: (Cout, Cin, 3, 3) PyTorch layout; bn_scale: (Cout,) folded BatchNorm scale.
    Returns (3, (w_out+2)*Cin, w_out*Cout) with
        B[ky][(w+kx)*Cin + ci, w*Cout + co] = bn_scale[co] * w[co, ci, ky, kx]
    """
    cout, cin, _, _ = w.shape
    wp = w_out + 2
    taps = jnp.transpose(w * bn_scale[:, None, None, None], (2, 3, 1, 0))  # (3,3,Cin,Cout)
    eye_w = np.eye(w_out, dtype=np.float32)
    blocks = []
    for ky in range(3):
        b = jnp.zeros((wp * cin, w_out * cout), jnp.float32)
        for kx in range(3):
            sel = np.zeros((wp, w_out), np.float32)
            sel[kx:kx + w_out, :] = eye_w                  # sel[wp, w] = 1 iff wp == w + kx
            b = b + jnp.kron(sel, taps[ky, kx])
        blocks.append(b)
    return jnp.stack(blocks, axis=0)


def _pad_k(b, k_pad):
    return jnp.pad(b, ((0, 0), (0, k_pad - b.shape[1]), (0, 0)))


def _fold_bn(gamma, beta, mean, var, eps=1e-5):
    scale = gamma / jnp.sqrt(var + eps)
    return scale, beta - mean * scale


# ------------------------------ forward (single fused pallas_call) ------------------------------

@jax.jit
def up_forward(x1_nchw, x2_nchw, params):
    """U-Net `Up` (bilinear=True).  x1: (N, C1, H1, W1), x2: (N, C2, H2, W2), NCHW f32."""
    N, C1, H1, W1 = x1_nchw.shape
    N2, C2, H2, W2 = x2_nchw.shape
    assert N2 == N
    Hup, Wup = 2 * H1, 2 * W1
    dY, dX = H2 - Hup, W2 - Wup
    assert dY >= 0 and dX >= 0, "upsampled x1 must not exceed x2 spatially"
    top, left = dY // 2, dX // 2

    w1, w2 = params["w1"], params["w2"]
    Cmid, Cin = w1.shape[0], w1.shape[1]
    Cout = w2.shape[0]
    assert Cin == C1 + C2

    # fold inference-mode BatchNorm into scale (-> weights) and bias
    s1, bias1_c = _fold_bn(params["bn1_gamma"], params["bn1_beta"],
                           params["bn1_mean"], params["bn1_var"])
    s2, bias2_c = _fold_bn(params["bn2_gamma"], params["bn2_beta"],
                           params["bn2_mean"], params["bn2_var"])

    # lane-flattened NHWC activations (contiguous reshapes are free)
    x1f = jnp.transpose(x1_nchw, (0, 2, 3, 1)).reshape(N, H1, W1 * C1)
    x2f = jnp.transpose(x2_nchw, (0, 2, 3, 1)).reshape(N, H2, W2 * C2)

    # bilinear row-interp matrix (H axis) used in-kernel
    ah = jnp.asarray(_interp_matrix(H1, Hup))                                  # (Hup, H1)

    # banded conv weights (BN scale folded), contraction dim padded to multiples of 128
    Wp = W2 + 2
    kpad2 = _round_up(Wp * C2, 128)
    kpadt = _round_up(W1 * C1, 128)
    kpadm = _round_up(Wp * Cmid, 128)

    b1a = _banded_conv_weights(w1[:, :C2], s1, W2)        # (3, Wp*C2,   W2*Cmid)  skip path
    b1b = _banded_conv_weights(w1[:, C2:], s1, W2)        # (3, Wp*C1,   W2*Cmid)  x1 path
    b2m = _banded_conv_weights(w2, s2, W2)                # (3, Wp*Cmid, W2*Cout)

    # fold bilinear COLUMN interpolation + F.pad column placement into the x1-path weights:
    #   uppad_row = (t_row @ kron(A_w^T, I_C1)) @ P  =>  contribution = t_row @ (kw @ P @ b1b)
    aw = _interp_matrix(W1, Wup)                                               # (Wup, W1)
    kw = np.kron(aw.T, np.eye(C1, dtype=np.float32))                           # (W1*C1, Wup*C1)
    P = np.zeros((Wup * C1, Wp * C1), np.float32)
    P[:, (1 + left) * C1:(1 + left + Wup) * C1] = np.eye(Wup * C1, dtype=np.float32)
    kw_full = jnp.asarray(kw @ P)                                              # (W1*C1, Wp*C1)
    b1b_fold = jnp.einsum('kp,rpo->rko', kw_full, b1b)                         # (3, W1*C1, W2*Cmid)

    # stack skip-path and x1-path weights along K -> conv1 is a single matmul per ky
    b1 = jnp.concatenate([_pad_k(b1a, kpad2), _pad_k(b1b_fold, kpadt)], axis=1)
    b2m = _pad_k(b2m, kpadm)

    bias1 = jnp.tile(bias1_c, W2).reshape(1, W2 * Cmid)
    bias2 = jnp.tile(bias2_c, W2).reshape(1, W2 * Cout)

    kernel = functools.partial(
        _up_doubleconv_kernel,
        C1=C1, C2=C2, Cmid=Cmid, Cout=Cout, H2=H2, W2=W2,
        Hup=Hup, W1=W1, top=top, kpad2=kpad2)

    cost = pl.CostEstimate(
        flops=2 * N * (Hup * H1 * W1 * C1
                       + H2 * 3 * (kpad2 + kpadt) * W2 * Cmid
                       + H2 * 3 * kpadm * W2 * Cout),
        transcendentals=0,
        bytes_accessed=4 * (x1f.size + x2f.size + ah.size + b1.size + b2m.size
                            + bias1.size + bias2.size + N * H2 * W2 * Cout))

    out_flat = pl.pallas_call(
        kernel,
        out_shape=jax.ShapeDtypeStruct((N, H2, W2 * Cout), jnp.float32),
        grid=(N,),
        in_specs=[
            pl.BlockSpec((1, H1, W1 * C1), lambda n: (n, 0, 0)),
            pl.BlockSpec((1, H2, W2 * C2), lambda n: (n, 0, 0)),
            pl.BlockSpec((Hup, H1), lambda n: (0, 0)),
            pl.BlockSpec((3, kpad2 + kpadt, W2 * Cmid), lambda n: (0, 0, 0)),
            pl.BlockSpec((3, kpadm, W2 * Cout), lambda n: (0, 0, 0)),
            pl.BlockSpec((1, W2 * Cmid), lambda n: (0, 0)),
            pl.BlockSpec((1, W2 * Cout), lambda n: (0, 0)),
        ],
        out_specs=pl.BlockSpec((1, H2, W2 * Cout), lambda n: (n, 0, 0)),
        scratch_shapes=[
            pltpu.VMEM((H2 + 2, kpad2 + kpadt), jnp.float32),  # padded [skip | row-interp x1]
            pltpu.VMEM((H2 + 2, kpadm), jnp.float32),          # padded conv1 output
        ],
        compiler_params=pltpu.CompilerParams(dimension_semantics=("parallel",)),
        cost_estimate=cost,
    )(x1f, x2f, ah, b1, b2m, bias1, bias2)

    out = out_flat.reshape(N, H2, W2, Cout)
    return jnp.transpose(out, (0, 3, 1, 2))              # back to NCHW


# ------------------------------ pure-JAX reference ------------------------------

def _bilinear_upsample_ref(x, h_out, w_out):
    """align_corners=True bilinear resize of NHWC x (gather-based, independent code path)."""
    n, h, w, c = x.shape
    def src(n_in, n_out):
        if n_out == 1:
            return jnp.zeros((n_out,), jnp.float32)
        return jnp.arange(n_out, dtype=jnp.float32) * ((n_in - 1) / (n_out - 1))
    sy, sx = src(h, h_out), src(w, w_out)
    y0 = jnp.clip(jnp.floor(sy).astype(jnp.int32), 0, h - 1)
    x0 = jnp.clip(jnp.floor(sx).astype(jnp.int32), 0, w - 1)
    y1 = jnp.minimum(y0 + 1, h - 1)
    x1 = jnp.minimum(x0 + 1, w - 1)
    fy = (sy - y0.astype(jnp.float32))[None, :, None, None]
    fx = (sx - x0.astype(jnp.float32))[None, None, :, None]
    tl = x[:, y0][:, :, x0]; tr = x[:, y0][:, :, x1]
    bl = x[:, y1][:, :, x0]; br = x[:, y1][:, :, x1]
    top = tl * (1 - fx) + tr * fx
    bot = bl * (1 - fx) + br * fx
    return top * (1 - fy) + bot * fy


def up_reference(x1_nchw, x2_nchw, params):
    x1 = jnp.transpose(x1_nchw, (0, 2, 3, 1))
    x2 = jnp.transpose(x2_nchw, (0, 2, 3, 1))
    _, h1, w1, _ = x1.shape
    _, h2, w2, _ = x2.shape
    x1u = _bilinear_upsample_ref(x1, 2 * h1, 2 * w1)
    dy, dx = h2 - x1u.shape[1], w2 - x1u.shape[2]
    x1u = jnp.pad(x1u, ((0, 0), (dy // 2, dy - dy // 2), (dx // 2, dx - dx // 2), (0, 0)))
    x = jnp.concatenate([x2, x1u], axis=-1)

    def conv_bn_relu(x, w, gamma, beta, mean, var):
        y = lax.conv_general_dilated(
            x, jnp.transpose(w, (2, 3, 1, 0)), (1, 1), "SAME",
            dimension_numbers=("NHWC", "HWIO", "NHWC"),
            precision=lax.Precision.HIGHEST)
        s = gamma / jnp.sqrt(var + 1e-5)
        return jnp.maximum(y * s + (beta - mean * s), 0.0)

    x = conv_bn_relu(x, params["w1"], params["bn1_gamma"], params["bn1_beta"],
                     params["bn1_mean"], params["bn1_var"])
    x = conv_bn_relu(x, params["w2"], params["bn2_gamma"], params["bn2_beta"],
                     params["bn2_mean"], params["bn2_var"])
    return jnp.transpose(x, (0, 3, 1, 2))


# ------------------------------ main ------------------------------

if __name__ == "__main__":
    key = jax.random.PRNGKey(0)
    ks = jax.random.split(key, 12)

    N = 2
    C1, C2 = 4, 4                     # x1 (upsampled path) / x2 (skip connection) channels
    Cin = C1 + C2                     # Up(in_channels=8, out_channels=8, bilinear=True)
    Cmid = Cin // 2                   # DoubleConv mid_channels = in_channels // 2
    Cout = 8
    H1 = W1 = 8
    H2 = W2 = 16

    x1 = jax.random.normal(ks[0], (N, C1, H1, W1), jnp.float32)
    x2 = jax.random.normal(ks[1], (N, C2, H2, W2), jnp.float32)

    params = {
        "w1": jax.random.normal(ks[2], (Cmid, Cin, 3, 3), jnp.float32) * 0.2,
        "bn1_gamma": 0.5 + jax.random.uniform(ks[3], (Cmid,), jnp.float32),
        "bn1_beta": jax.random.normal(ks[4], (Cmid,), jnp.float32) * 0.1,
        "bn1_mean": jax.random.normal(ks[5], (Cmid,), jnp.float32) * 0.1,
        "bn1_var": 0.5 + jax.random.uniform(ks[6], (Cmid,), jnp.float32),
        "w2": jax.random.normal(ks[7], (Cout, Cmid, 3, 3), jnp.float32) * 0.2,
        "bn2_gamma": 0.5 + jax.random.uniform(ks[8], (Cout,), jnp.float32),
        "bn2_beta": jax.random.normal(ks[9], (Cout,), jnp.float32) * 0.1,
        "bn2_mean": jax.random.normal(ks[10], (Cout,), jnp.float32) * 0.1,
        "bn2_var": 0.5 + jax.random.uniform(ks[11], (Cout,), jnp.float32),
    }

    out = jax.block_until_ready(up_forward(x1, x2, params))
    ref = jax.block_until_ready(up_reference(x1, x2, params))

    assert out.shape == (N, Cout, H2, W2), out.shape
    max_err = float(jnp.max(jnp.abs(out - ref)))
    assert jnp.allclose(out, ref, atol=1e-3, rtol=1e-3), max_err
    print("KERNEL_OK")
</pallas_src>

<mosaic_0001>
module attributes {stable_mosaic.version = 11 : i64} {
  func.func @_up_doubleconv_kernel(%arg0: i32, %arg1: memref<1x8x32xf32, #tpu.memory_space<vmem>>, %arg2: memref<1x16x64xf32, #tpu.memory_space<vmem>>, %arg3: memref<16x8xf32, #tpu.memory_space<vmem>>, %arg4: memref<3x256x64xf32, #tpu.memory_space<vmem>>, %arg5: memref<3x128x128xf32, #tpu.memory_space<vmem>>, %arg6: memref<1x64xf32, #tpu.memory_space<vmem>>, %arg7: memref<1x128xf32, #tpu.memory_space<vmem>>, %arg8: memref<1x16x128xf32, #tpu.memory_space<vmem>>, %arg9: memref<18x256xf32, #tpu.memory_space<vmem>>, %arg10: memref<18x128xf32, #tpu.memory_space<vmem>>) attributes {dimension_semantics = [#tpu.dimension_semantics<parallel>], iteration_bounds = array<i64: 2>, scalar_prefetch = 0 : i64, scratch_operands = 2 : i64, tpu.core_type = #tpu.core_type<tc>, window_params = [{transform_indices = @transform_0, window_bounds = array<i64: 1, 8, 32>}, {transform_indices = @transform_1, window_bounds = array<i64: 1, 16, 64>}, {pipeline_mode = #tpu.pipeline_mode<synchronous>, transform_indices = @transform_2, window_bounds = array<i64: 16, 8>}, {pipeline_mode = #tpu.pipeline_mode<synchronous>, transform_indices = @transform_3, window_bounds = array<i64: 3, 256, 64>}, {pipeline_mode = #tpu.pipeline_mode<synchronous>, transform_indices = @transform_4, window_bounds = array<i64: 3, 128, 128>}, {pipeline_mode = #tpu.pipeline_mode<synchronous>, transform_indices = @transform_5, window_bounds = array<i64: 1, 64>}, {pipeline_mode = #tpu.pipeline_mode<synchronous>, transform_indices = @transform_6, window_bounds = array<i64: 1, 128>}, {transform_indices = @transform_7, window_bounds = array<i64: 1, 16, 128>}]} {
    %cst = arith.constant 0.000000e+00 : f32
    %0 = vector.broadcast %cst : f32 to vector<18x256xf32>
    %c0 = arith.constant 0 : index
    %c0_0 = arith.constant 0 : index
    %1 = vector.load %arg9[%c0, %c0_0] : memref<18x256xf32, #tpu.memory_space<vmem>>, vector<18x256xf32>
    tpu.vector_store %arg9[%c0, %c0_0], %0 {strides = array<i32>} : memref<18x256xf32, #tpu.memory_space<vmem>>, vector<18x256xf32>,
    %cst_1 = arith.constant 0.000000e+00 : f32
    %2 = vector.broadcast %cst_1 : f32 to vector<18x128xf32>
    %c0_2 = arith.constant 0 : index
    %c0_3 = arith.constant 0 : index
    %3 = vector.load %arg10[%c0_2, %c0_3] : memref<18x128xf32, #tpu.memory_space<vmem>>, vector<18x128xf32>
    tpu.vector_store %arg10[%c0_2, %c0_3], %2 {strides = array<i32>} : memref<18x128xf32, #tpu.memory_space<vmem>>, vector<18x128xf32>,
    %c0_4 = arith.constant 0 : index
    %c0_5 = arith.constant 0 : index
    %4 = vector.load %arg3[%c0_4, %c0_5] : memref<16x8xf32, #tpu.memory_space<vmem>>, vector<16x8xf32>
    %c0_6 = arith.constant 0 : index
    %c0_7 = arith.constant 0 : index
    %c0_8 = arith.constant 0 : index
    %5 = vector.load %arg1[%c0_6, %c0_7, %c0_8] : memref<1x8x32xf32, #tpu.memory_space<vmem>>, vector<1x8x32xf32>
    %6 = vector.shape_cast %5 : vector<1x8x32xf32> to vector<8x32xf32>
    %cst_9 = arith.constant dense<0.000000e+00> : vector<16x32xf32>
    %7 = tpu.matmul %4, %6, %cst_9 {dimension_numbers = #tpu.dot_dimension_numbers<[1], [0], [0], [1], [0, 0, 1, 1], [], []>} : vector<16x8xf32>, vector<8x32xf32>, vector<16x32xf32> -> vector<16x32xf32>
    %c0_10 = arith.constant 0 : index
    %c0_11 = arith.constant 0 : index
    %c0_12 = arith.constant 0 : index
    %8 = vector.load %arg2[%c0_10, %c0_11, %c0_12] : memref<1x16x64xf32, #tpu.memory_space<vmem>>, vector<1x16x64xf32>
    %9 = vector.shape_cast %8 : vector<1x16x64xf32> to vector<16x64xf32>
    %c1 = arith.constant 1 : index
    %c4 = arith.constant 4 : index
    %10 = vector.load %arg9[%c1, %c4] : memref<18x256xf32, #tpu.memory_space<vmem>>, vector<16x64xf32>
    tpu.vector_store %arg9[%c1, %c4], %9 {strides = array<i32>} : memref<18x256xf32, #tpu.memory_space<vmem>>, vector<16x64xf32>,
    %c1_13 = arith.constant 1 : index
    %c128 = arith.constant 128 : index
    %11 = vector.load %arg9[%c1_13, %c128] : memref<18x256xf32, #tpu.memory_space<vmem>>, vector<16x32xf32>
    tpu.vector_store %arg9[%c1_13, %c128], %7 {strides = array<i32>} : memref<18x256xf32, #tpu.memory_space<vmem>>, vector<16x32xf32>,
    %cst_14 = arith.constant 0.000000e+00 : f32
    %12 = vector.broadcast %cst_14 : f32 to vector<16x64xf32>
    %c0_15 = arith.constant 0 : index
    %c0_16 = arith.constant 0 : index
    %13 = vector.load %arg9[%c0_15, %c0_16] : memref<18x256xf32, #tpu.memory_space<vmem>>, vector<16x256xf32>
    %c0_17 = arith.constant 0 : index
    %c0_18 = arith.constant 0 : index
    %c0_19 = arith.constant 0 : index
    %14 = vector.load %arg4[%c0_17, %c0_18, %c0_19] : memref<3x256x64xf32, #tpu.memory_space<vmem>>, vector<1x256x64xf32>
    %15 = vector.shape_cast %14 : vector<1x256x64xf32> to vector<256x64xf32>
    %cst_20 = arith.constant dense<0.000000e+00> : vector<16x64xf32>
    %16 = tpu.matmul %13, %15, %cst_20 {dimension_numbers = #tpu.dot_dimension_numbers<[1], [0], [0], [1], [0, 0, 1, 1], [], []>} : vector<16x256xf32>, vector<256x64xf32>, vector<16x64xf32> -> vector<16x64xf32>
    %17 = arith.addf %12, %16 : vector<16x64xf32>
    %c1_21 = arith.constant 1 : index
    %c0_22 = arith.constant 0 : index
    %18 = vector.load %arg9[%c1_21, %c0_22] : memref<18x256xf32, #tpu.memory_space<vmem>>, vector<16x256xf32>
    %c1_23 = arith.constant 1 : index
    %c0_24 = arith.constant 0 : index
    %c0_25 = arith.constant 0 : index
    %19 = vector.load %arg4[%c1_23, %c0_24, %c0_25] : memref<3x256x64xf32, #tpu.memory_space<vmem>>, vector<1x256x64xf32>
    %20 = vector.shape_cast %19 : vector<1x256x64xf32> to vector<256x64xf32>
    %cst_26 = arith.constant dense<0.000000e+00> : vector<16x64xf32>
    %21 = tpu.matmul %18, %20, %cst_26 {dimension_numbers = #tpu.dot_dimension_numbers<[1], [0], [0], [1], [0, 0, 1, 1], [], []>} : vector<16x256xf32>, vector<256x64xf32>, vector<16x64xf32> -> vector<16x64xf32>
    %22 = arith.addf %17, %21 : vector<16x64xf32>
    %c2 = arith.constant 2 : index
    %c0_27 = arith.constant 0 : index
    %23 = vector.load %arg9[%c2, %c0_27] : memref<18x256xf32, #tpu.memory_space<vmem>>, vector<16x256xf32>
    %c2_28 = arith.constant 2 : index
    %c0_29 = arith.constant 0 : index
    %c0_30 = arith.constant 0 : index
    %24 = vector.load %arg4[%c2_28, %c0_29, %c0_30] : memref<3x256x64xf32, #tpu.memory_space<vmem>>, vector<1x256x64xf32>
    %25 = vector.shape_cast %24 : vector<1x256x64xf32> to vector<256x64xf32>
    %cst_31 = arith.constant dense<0.000000e+00> : vector<16x64xf32>
    %26 = tpu.matmul %23, %25, %cst_31 {dimension_numbers = #tpu.dot_dimension_numbers<[1], [0], [0], [1], [0, 0, 1, 1], [], []>} : vector<16x256xf32>, vector<256x64xf32>, vector<16x64xf32> -> vector<16x64xf32>
    %27 = arith.addf %22, %26 : vector<16x64xf32>
    %c0_32 = arith.constant 0 : index
    %c0_33 = arith.constant 0 : index
    %28 = vector.load %arg6[%c0_32, %c0_33] : memref<1x64xf32, #tpu.memory_space<vmem>>, vector<1x64xf32>
    %29 = vector.broadcast %28 : vector<1x64xf32> to vector<16x64xf32>
    %30 = arith.addf %27, %29 : vector<16x64xf32>
    %cst_34 = arith.constant 0.000000e+00 : f32
    %31 = vector.broadcast %cst_34 : f32 to vector<16x64xf32>
    %32 = arith.maximumf %30, %31 : vector<16x64xf32>
    %c1_35 = arith.constant 1 : index
    %c4_36 = arith.constant 4 : index
    %33 = vector.load %arg10[%c1_35, %c4_36] : memref<18x128xf32, #tpu.memory_space<vmem>>, vector<16x64xf32>
    tpu.vector_store %arg10[%c1_35, %c4_36], %32 {strides = array<i32>} : memref<18x128xf32, #tpu.memory_space<vmem>>, vector<16x64xf32>,
    %cst_37 = arith.constant 0.000000e+00 : f32
    %34 = vector.broadcast %cst_37 : f32 to vector<16x128xf32>
    %c0_38 = arith.constant 0 : index
    %c0_39 = arith.constant 0 : index
    %35 = vector.load %arg10[%c0_38, %c0_39] : memref<18x128xf32, #tpu.memory_space<vmem>>, vector<16x128xf32>
    %c0_40 = arith.constant 0 : index
    %c0_41 = arith.constant 0 : index
    %c0_42 = arith.constant 0 : index
    %36 = vector.load %arg5[%c0_40, %c0_41, %c0_42] : memref<3x128x128xf32, #tpu.memory_space<vmem>>, vector<1x128x128xf32>
    %37 = vector.shape_cast %36 : vector<1x128x128xf32> to vector<128x128xf32>
    %cst_43 = arith.constant dense<0.000000e+00> : vector<16x128xf32>
    %38 = tpu.matmul %35, %37, %cst_43 {dimension_numbers = #tpu.dot_dimension_numbers<[1], [0], [0], [1], [0, 0, 1, 1], [], []>} : vector<16x128xf32>, vector<128x128xf32>, vector<16x128xf32> -> vector<16x128xf32>
    %39 = arith.addf %34, %38 : vector<16x128xf32>
    %c1_44 = arith.constant 1 : index
    %c0_45 = arith.constant 0 : index
    %40 = vector.load %arg10[%c1_44, %c0_45] : memref<18x128xf32, #tpu.memory_space<vmem>>, vector<16x128xf32>
    %c1_46 = arith.constant 1 : index
    %c0_47 = arith.constant 0 : index
    %c0_48 = arith.constant 0 : index
    %41 = vector.load %arg5[%c1_46, %c0_47, %c0_48] : memref<3x128x128xf32, #tpu.memory_space<vmem>>, vector<1x128x128xf32>
    %42 = vector.shape_cast %41 : vector<1x128x128xf32> to vector<128x128xf32>
    %cst_49 = arith.constant dense<0.000000e+00> : vector<16x128xf32>
    %43 = tpu.matmul %40, %42, %cst_49 {dimension_numbers = #tpu.dot_dimension_numbers<[1], [0], [0], [1], [0, 0, 1, 1], [], []>} : vector<16x128xf32>, vector<128x128xf32>, vector<16x128xf32> -> vector<16x128xf32>
    %44 = arith.addf %39, %43 : vector<16x128xf32>
    %c2_50 = arith.constant 2 : index
    %c0_51 = arith.constant 0 : index
    %45 = vector.load %arg10[%c2_50, %c0_51] : memref<18x128xf32, #tpu.memory_space<vmem>>, vector<16x128xf32>
    %c2_52 = arith.constant 2 : index
    %c0_53 = arith.constant 0 : index
    %c0_54 = arith.constant 0 : index
    %46 = vector.load %arg5[%c2_52, %c0_53, %c0_54] : memref<3x128x128xf32, #tpu.memory_space<vmem>>, vector<1x128x128xf32>
    %47 = vector.shape_cast %46 : vector<1x128x128xf32> to vector<128x128xf32>
    %cst_55 = arith.constant dense<0.000000e+00> : vector<16x128xf32>
    %48 = tpu.matmul %45, %47, %cst_55 {dimension_numbers = #tpu.dot_dimension_numbers<[1], [0], [0], [1], [0, 0, 1, 1], [], []>} : vector<16x128xf32>, vector<128x128xf32>, vector<16x128xf32> -> vector<16x128xf32>
    %49 = arith.addf %44, %48 : vector<16x128xf32>
    %c0_56 = arith.constant 0 : index
    %c0_57 = arith.constant 0 : index
    %50 = vector.load %arg7[%c0_56, %c0_57] : memref<1x128xf32, #tpu.memory_space<vmem>>, vector<1x128xf32>
    %51 = vector.broadcast %50 : vector<1x128xf32> to vector<16x128xf32>
    %52 = arith.addf %49, %51 : vector<16x128xf32>
    %cst_58 = arith.constant 0.000000e+00 : f32
    %53 = vector.broadcast %cst_58 : f32 to vector<16x128xf32>
    %54 = arith.maximumf %52, %53 : vector<16x128xf32>
    %c0_59 = arith.constant 0 : index
    %c0_60 = arith.constant 0 : index
    %c0_61 = arith.constant 0 : index
    %55 = vector.load %arg8[%c0_59, %c0_60, %c0_61] : memref<1x16x128xf32, #tpu.memory_space<vmem>>, vector<1x16x128xf32>
    %56 = vector.shape_cast %55 : vector<1x16x128xf32> to vector<16x128xf32>
    %57 = vector.shape_cast %54 : vector<16x128xf32> to vector<1x16x128xf32>
    tpu.vector_store %arg8[%c0_59, %c0_60, %c0_61], %57 {strides = array<i32>} : memref<1x16x128xf32, #tpu.memory_space<vmem>>, vector<1x16x128xf32>,
    return
  }
  func.func @transform_0(%arg0: i32) -> (i32, i32, i32) {
    %c0_i32 = arith.constant 0 : i32
    %c0_i32_0 = arith.constant 0 : i32
    %c0_i32_1 = arith.constant 0 : i32
    return %arg0, %c0_i32, %c0_i32_0 : i32, i32, i32
  }
  func.func @transform_1(%arg0: i32) -> (i32, i32, i32) {
    %c0_i32 = arith.constant 0 : i32
    %c0_i32_0 = arith.constant 0 : i32
    %c0_i32_1 = arith.constant 0 : i32
    return %arg0, %c0_i32, %c0_i32_0 : i32, i32, i32
  }
  func.func @transform_2(%arg0: i32) -> (i32, i32) {
    %c0_i32 = arith.constant 0 : i32
    %c0_i32_0 = arith.constant 0 : i32
    %c0_i32_1 = arith.constant 0 : i32
    return %c0_i32, %c0_i32_0 : i32, i32
  }
  func.func @transform_3(%arg0: i32) -> (i32, i32, i32) {
    %c0_i32 = arith.constant 0 : i32
    %c0_i32_0 = arith.constant 0 : i32
    %c0_i32_1 = arith.constant 0 : i32
    %c0_i32_2 = arith.constant 0 : i32
    return %c0_i32, %c0_i32_0, %c0_i32_1 : i32, i32, i32
  }
  func.func @transform_4(%arg0: i32) -> (i32, i32, i32) {
    %c0_i32 = arith.constant 0 : i32
    %c0_i32_0 = arith.constant 0 : i32
    %c0_i32_1 = arith.constant 0 : i32
    %c0_i32_2 = arith.constant 0 : i32
    return %c0_i32, %c0_i32_0, %c0_i32_1 : i32, i32, i32
  }
  func.func @transform_5(%arg0: i32) -> (i32, i32) {
    %c0_i32 = arith.constant 0 : i32
    %c0_i32_0 = arith.constant 0 : i32
    %c0_i32_1 = arith.constant 0 : i32
    return %c0_i32, %c0_i32_0 : i32, i32
  }
  func.func @transform_6(%arg0: i32) -> (i32, i32) {
    %c0_i32 = arith.constant 0 : i32
    %c0_i32_0 = arith.constant 0 : i32
    %c0_i32_1 = arith.constant 0 : i32
    return %c0_i32, %c0_i32_0 : i32, i32
  }
  func.func @transform_7(%arg0: i32) -> (i32, i32, i32) {
    %c0_i32 = arith.constant 0 : i32
    %c0_i32_0 = arith.constant 0 : i32
    %c0_i32_1 = arith.constant 0 : i32
    return %arg0, %c0_i32, %c0_i32_0 : i32, i32, i32
  }
}

</mosaic_0001>

<llo_original>
// kernel: tile.13
$region0: #{tile.13}
  #allocation0 [shape = 's32[1]{0}', space=sflag, size = 0x4, scoped, tag = 'scoped memory for tile.13']
  %s0 = inlined_call_operand.vmem [shape: f32[4], index: 0, kind: input, shape index: {}]
  %s1 = inlined_call_operand.vmem [shape: f32[16,4], index: 1, kind: output, shape index: {}]
  // Predicated region
  $region2: #{tile.13} parent=0 // pred_check
    _
  $region3: #{tile.13} parent=0 // pred_check_branch
    %3 = sbr.rel (0) target = $region5
  $region4: #{tile.13} parent=0 // pred_region
    _
  $region5: #{tile.13} parent=0 // pred_fallthru
    _
  %v4 = vld [vmem:[%s0] ss:$0 sm:$0xff]
  %5 = vst [vmem:[%s1] sm:$0xff] %v4
  %s6 = scalar_lea.vmem %s1, 8
  %7 = vst [vmem:[%s6] sm:$0xff] %v4

// kernel: tile.14
$region0: #{tile.14}
  %s0 = inlined_call_operand.vmem [shape: f32[16,4], index: 0, kind: input, shape index: {}]
  %s1 = inlined_call_operand.vmem [shape: f32[1,64], index: 1, kind: output, shape index: {}]
  $region1: #{tile.14} parent=0
    #allocation0 [shape = 'u8[4096]{0}', space=vmem, size = 0x1000, scoped, tag = 'scoped mem for output reshape']
    %v2 = vld [vmem:[%s0] sm:$0x1]
    %vm3 = vcmask 31744
    %4 = vst.msk [vmem:[#allocation0] sm:$0x1] %vm3, %v2
    %s5 = scalar_lea.vmem %s0, 15
    %v6 = vld [vmem:[%s5] sm:$0x1]
    %7 = vrot.lane.b32.xlu0 %v6, 60
    %v8 = vpop.permute.xlu0 %7
    %vm9 = vcmask 523744
    %10 = vst.msk [vmem:[#allocation0] sm:$0x1] %vm9, %v8
    %s11 = scalar_lea.vmem %s0, 14
    %v12 = vld [vmem:[%s11] sm:$0x1]
    %13 = vrot.lane.b32.xlu0 %v12, 56
    %v14 = vpop.permute.xlu0 %13
    %vm15 = vcmask 490944
    %16 = vst.msk [vmem:[#allocation0] sm:$0x1] %vm15, %v14
    %s17 = scalar_lea.vmem %s0, 13
    %v18 = vld [vmem:[%s17] sm:$0x1]
    %19 = vrot.lane.b32.xlu0 %v18, 52
    %v20 = vpop.permute.xlu0 %19
    %vm21 = vcmask 458144
    %22 = vst.msk [vmem:[#allocation0] sm:$0x1] %vm21, %v20
    %s23 = scalar_lea.vmem %s0, 12
    %v24 = vld [vmem:[%s23] sm:$0x1]
    %25 = vrot.lane.b32.xlu0 %v24, 48
    %v26 = vpop.permute.xlu0 %25
    %vm27 = vcmask 425344
    %28 = vst.msk [vmem:[#allocation0] sm:$0x1] %vm27, %v26
    %s29 = scalar_lea.vmem %s0, 11
    %v30 = vld [vmem:[%s29] sm:$0x1]
    %31 = vrot.lane.b32.xlu0 %v30, 44
    %v32 = vpop.permute.xlu0 %31
    %vm33 = vcmask 392544
    %34 = vst.msk [vmem:[#allocation0] sm:$0x1] %vm33, %v32
    %s35 = scalar_lea.vmem %s0, 10
    %v36 = vld [vmem:[%s35] sm:$0x1]
    %37 = vrot.lane.b32.xlu0 %v36, 40
    %v38 = vpop.permute.xlu0 %37
    %vm39 = vcmask 359744
    %40 = vst.msk [vmem:[#allocation0] sm:$0x1] %vm39, %v38
    %s41 = scalar_lea.vmem %s0, 9
    %v42 = vld [vmem:[%s41] sm:$0x1]
    %43 = vrot.lane.b32.xlu0 %v42, 36
    %v44 = vpop.permute.xlu0 %43
    %vm45 = vcmask 326944
    %46 = vst.msk [vmem:[#allocation0] sm:$0x1] %vm45, %v44
    %s47 = scalar_lea.vmem %s0, 8
    %v48 = vld [vmem:[%s47] sm:$0x1]
    %49 = vrot.lane.b32.xlu0 %v48, 32
    %v50 = vpop.permute.xlu0 %49
    %vm51 = vcmask 294144
    %52 = vst.msk [vmem:[#allocation0] sm:$0x1] %vm51, %v50
    %s53 = scalar_lea.vmem %s0, 7
    %v54 = vld [vmem:[%s53] sm:$0x1]
    %55 = vrot.lane.b32.xlu0 %v54, 28
    %v56 = vpop.permute.xlu0 %55
    %vm57 = vcmask 261344
    %58 = vst.msk [vmem:[#allocation0] sm:$0x1] %vm57, %v56
    %s59 = scalar_lea.vmem %s0, 6
    %v60 = vld [vmem:[%s59] sm:$0x1]
    %61 = vrot.lane.b32.xlu0 %v60, 24
    %v62 = vpop.permute.xlu0 %61
    %vm63 = vcmask 228544
    %64 = vst.msk [vmem:[#allocation0] sm:$0x1] %vm63, %v62
    %s65 = scalar_lea.vmem %s0, 5
    %v66 = vld [vmem:[%s65] sm:$0x1]
    %67 = vrot.lane.b32.xlu0 %v66, 20
    %v68 = vpop.permute.xlu0 %67
    %vm69 = vcmask 195744
    %70 = vst.msk [vmem:[#allocation0] sm:$0x1] %vm69, %v68
    %s71 = scalar_lea.vmem %s0, 4
    %v72 = vld [vmem:[%s71] sm:$0x1]
    %73 = vrot.lane.b32.xlu0 %v72, 16
    %v74 = vpop.permute.xlu0 %73
    %vm75 = vcmask 162944
    %76 = vst.msk [vmem:[#allocation0] sm:$0x1] %vm75, %v74
    %s77 = scalar_lea.vmem %s0, 3
    %v78 = vld [vmem:[%s77] sm:$0x1]
    %79 = vrot.lane.b32.xlu0 %v78, 12
    %v80 = vpop.permute.xlu0 %79
    %vm81 = vcmask 130144
    %82 = vst.msk [vmem:[#allocation0] sm:$0x1] %vm81, %v80
    %s83 = scalar_lea.vmem %s0, 2
    %v84 = vld [vmem:[%s83] sm:$0x1]
    %85 = vrot.lane.b32.xlu0 %v84, 8
    %v86 = vpop.permute.xlu0 %85
    %vm87 = vcmask 97344
    %88 = vst.msk [vmem:[#allocation0] sm:$0x1] %vm87, %v86
    %s89 = scalar_lea.vmem %s0, 1
    %v90 = vld [vmem:[%s89] sm:$0x1]
    %91 = vrot.lane.b32.xlu0 %v90, 4
    %v92 = vpop.permute.xlu0 %91
    %vm93 = vcmask 64544
    %94 = vst.msk [vmem:[#allocation0] sm:$0x1] %vm93, %v92
    %s96 = ssub.s32 2, 1
    %v97 = vld [vmem:[#allocation0] sm:%s96]
    %s99 = ssub.s32 2, 1
    %100 = vst [vmem:[%s1] sm:%s99] %v97

// kernel: tile.18
$region0: #{tile.18}
  #allocation0 [shape = 's32[1]{0}', space=sflag, size = 0x4, scoped, tag = 'scoped memory for tile.18']
  %s0 = inlined_call_operand.vmem [shape: f32[8], index: 0, kind: input, shape index: {}]
  %s1 = inlined_call_operand.vmem [shape: f32[16,8], index: 1, kind: output, shape index: {}]
  // Predicated region
  $region2: #{tile.18} parent=0 // pred_check
    _
  $region3: #{tile.18} parent=0 // pred_check_branch
    %3 = sbr.rel (0) target = $region5
  $region4: #{tile.18} parent=0 // pred_region
    _
  $region5: #{tile.18} parent=0 // pred_fallthru
    _
  %v4 = vld [vmem:[%s0] ss:$0 sm:$0xff]
  %5 = vst [vmem:[%s1] sm:$0xff] %v4
  %s6 = scalar_lea.vmem %s1, 8
  %7 = vst [vmem:[%s6] sm:$0xff] %v4

// kernel: tile.19
$region0: #{tile.19}
  %s0 = inlined_call_operand.vmem [shape: f32[16,8], index: 0, kind: input, shape index: {}]
  %s1 = inlined_call_operand.vmem [shape: f32[1,128], index: 1, kind: output, shape index: {}]
  $region1: #{tile.19} parent=0
    #allocation0 [shape = 'u8[4096]{0}', space=vmem, size = 0x1000, scoped, tag = 'scoped mem for output reshape']
    %v2 = vld [vmem:[%s0] sm:$0x1]
    %vm3 = vcmask 64512
    %4 = vst.msk [vmem:[#allocation0] sm:$0x1] %vm3, %v2
    %s5 = scalar_lea.vmem %s0, 15
    %v6 = vld [vmem:[%s5] sm:$0x1]
    %7 = vrot.lane.b32.xlu0 %v6, 120
    %v8 = vpop.permute.xlu0 %7
    %vm9 = vcmask 1048512
    %10 = vst.msk [vmem:[#allocation0] sm:$0x1] %vm9, %v8
    %s11 = scalar_lea.vmem %s0, 14
    %v12 = vld [vmem:[%s11] sm:$0x1]
    %13 = vrot.lane.b32.xlu0 %v12, 112
    %v14 = vpop.permute.xlu0 %13
    %vm15 = vcmask 982912
    %16 = vst.msk [vmem:[#allocation0] sm:$0x1] %vm15, %v14
    %s17 = scalar_lea.vmem %s0, 13
    %v18 = vld [vmem:[%s17] sm:$0x1]
    %19 = vrot.lane.b32.xlu0 %v18, 104
    %v20 = vpop.permute.xlu0 %19
    %vm21 = vcmask 917312
    %22 = vst.msk [vmem:[#allocation0] sm:$0x1] %vm21, %v20
    %s23 = scalar_lea.vmem %s0, 12
    %v24 = vld [vmem:[%s23] sm:$0x1]
    %25 = vrot.lane.b32.xlu0 %v24, 96
    %v26 = vpop.permute.xlu0 %25
    %vm27 = vcmask 851712
    %28 = vst.msk [vmem:[#allocation0] sm:$0x1] %vm27, %v26
    %s29 = scalar_lea.vmem %s0, 11
    %v30 = vld [vmem:[%s29] sm:$0x1]
    %31 = vrot.lane.b32.xlu0 %v30, 88
    %v32 = vpop.permute.xlu0 %31
    %vm33 = vcmask 786112
    %34 = vst.msk [vmem:[#allocation0] sm:$0x1] %vm33, %v32
    %s35 = scalar_lea.vmem %s0, 10
    %v36 = vld [vmem:[%s35] sm:$0x1]
    %37 = vrot.lane.b32.xlu0 %v36, 80
    %v38 = vpop.permute.xlu0 %37
    %vm39 = vcmask 720512
    %40 = vst.msk [vmem:[#allocation0] sm:$0x1] %vm39, %v38
    %s41 = scalar_lea.vmem %s0, 9
    %v42 = vld [vmem:[%s41] sm:$0x1]
    %43 = vrot.lane.b32.xlu0 %v42, 72
    %v44 = vpop.permute.xlu0 %43
    %vm45 = vcmask 654912
    %46 = vst.msk [vmem:[#allocation0] sm:$0x1] %vm45, %v44
    %s47 = scalar_lea.vmem %s0, 8
    %v48 = vld [vmem:[%s47] sm:$0x1]
    %49 = vrot.lane.b32.xlu0 %v48, 64
    %v50 = vpop.permute.xlu0 %49
    %vm51 = vcmask 589312
    %52 = vst.msk [vmem:[#allocation0] sm:$0x1] %vm51, %v50
    %s53 = scalar_lea.vmem %s0, 7
    %v54 = vld [vmem:[%s53] sm:$0x1]
    %55 = vrot.lane.b32.xlu0 %v54, 56
    %v56 = vpop.permute.xlu0 %55
    %vm57 = vcmask 523712
    %58 = vst.msk [vmem:[#allocation0] sm:$0x1] %vm57, %v56
    %s59 = scalar_lea.vmem %s0, 6
    %v60 = vld [vmem:[%s59] sm:$0x1]
    %61 = vrot.lane.b32.xlu0 %v60, 48
    %v62 = vpop.permute.xlu0 %61
    %vm63 = vcmask 458112
    %64 = vst.msk [vmem:[#allocation0] sm:$0x1] %vm63, %v62
    %s65 = scalar_lea.vmem %s0, 5
    %v66 = vld [vmem:[%s65] sm:$0x1]
    %67 = vrot.lane.b32.xlu0 %v66, 40
    %v68 = vpop.permute.xlu0 %67
    %vm69 = vcmask 392512
    %70 = vst.msk [vmem:[#allocation0] sm:$0x1] %vm69, %v68
    %s71 = scalar_lea.vmem %s0, 4
    %v72 = vld [vmem:[%s71] sm:$0x1]
    %73 = vrot.lane.b32.xlu0 %v72, 32
    %v74 = vpop.permute.xlu0 %73
    %vm75 = vcmask 326912
    %76 = vst.msk [vmem:[#allocation0] sm:$0x1] %vm75, %v74
    %s77 = scalar_lea.vmem %s0, 3
    %v78 = vld [vmem:[%s77] sm:$0x1]
    %79 = vrot.lane.b32.xlu0 %v78, 24
    %v80 = vpop.permute.xlu0 %79
    %vm81 = vcmask 261312
    %82 = vst.msk [vmem:[#allocation0] sm:$0x1] %vm81, %v80
    %s83 = scalar_lea.vmem %s0, 2
    %v84 = vld [vmem:[%s83] sm:$0x1]
    %85 = vrot.lane.b32.xlu0 %v84, 16
    %v86 = vpop.permute.xlu0 %85
    %vm87 = vcmask 195712
    %88 = vst.msk [vmem:[#allocation0] sm:$0x1] %vm87, %v86
    %s89 = scalar_lea.vmem %s0, 1
    %v90 = vld [vmem:[%s89] sm:$0x1]
    %91 = vrot.lane.b32.xlu0 %v90, 8
    %v92 = vpop.permute.xlu0 %91
    %vm93 = vcmask 130112
    %94 = vst.msk [vmem:[#allocation0] sm:$0x1] %vm93, %v92
    %s96 = ssub.s32 2, 1
    %v97 = vld [vmem:[#allocation0] sm:%s96]
    %s99 = ssub.s32 2, 1
    %100 = vst [vmem:[%s1] sm:%s99] %v97

// kernel: up_forward.1
$region0: #{up_forward.1}
  #allocation0 [shape = 'u32[]', space=smem, size = 0x4, offset = 0x4, fixed_abs, tag = 'smem constant byte address 0x4 - core index']
  #allocation1 [shape = 'u32[72,128]{1,0:T(1,128)}', space=vmem, size = 0x9000, scoped, tag = 'internal scratch']
  #allocation2 [shape = 'f32[18,256]{1,0:T(8,128)}', space=vmem, size = 0x6000, scoped, tag = 'scratch operand']
  #allocation3 [shape = 'f32[18,128]{1,0:T(8,128)}', space=vmem, size = 0x3000, scoped, tag = 'scratch operand']
  %s0 = inlined_call_operand.vmem [shape: f32[2,8,32], index: 0, kind: input, shape index: {}]
  %s1 = inlined_call_operand.vmem [shape: f32[2,16,64], index: 1, kind: input, shape index: {}]
  %s2 = inlined_call_operand.vmem [shape: f32[16,8], index: 2, kind: input, shape index: {}]
  %s3 = inlined_call_operand.vmem [shape: f32[3,256,64], index: 3, kind: input, shape index: {}]
  %s4 = inlined_call_operand.vmem [shape: f32[3,128,128], index: 4, kind: input, shape index: {}]
  %s5 = inlined_call_operand.vmem [shape: f32[1,64], index: 5, kind: input, shape index: {}]
  %s6 = inlined_call_operand.vmem [shape: f32[1,128], index: 6, kind: input, shape index: {}]
  %s7 = inlined_call_operand.vmem [shape: f32[2,16,128], index: 7, kind: output, shape index: {}]
  %s8 = sld [smem:[#allocation0]]
  $region61: #{up_forward.1} parent=0
    _
  %s10 = ssub.s32 1, %s8
  %s11 = scalar_select 0, %s10, %s8
  loop: start=0, step=1, limit=4
  $region2: #{up_forward.1} parent=0 // loop_pre_header
    _
  $region3: #{up_forward.1} parent=0 // loop_header
    %s13 = sphi 0, %s17
    %p14 = scmp.ge.s32.totalorder %s13, 4
    %s23 = sphi 0, %s25
    %s26 = sphi 0, %s23
    %s27 = sphi 0, %s26
    %s43 = sphi 0, %s27
    %s49 = sphi 0, %s51
    %s52 = sphi 0, %s49
    %s53 = sphi 0, %s52
    %s69 = sphi 0, %s53
    %s73 = sphi 0, %s73
    %s75 = sphi 0, %s73
    %s76 = sphi 0, %s75
    %s90 = sphi 0, %s76
    %s94 = sphi 0, %s94
    %s96 = sphi 0, %s94
    %s97 = sphi 0, %s96
    %s111 = sphi 0, %s97
    %s115 = sphi 0, %s115
    %s117 = sphi 0, %s115
    %s118 = sphi 0, %s117
    %s132 = sphi 0, %s118
    %s136 = sphi 0, %s136
    %s138 = sphi 0, %s136
    %s139 = sphi 0, %s138
    %s153 = sphi 0, %s139
    %s157 = sphi 0, %s157
    %s159 = sphi 0, %s157
    %s160 = sphi 0, %s159
    %s174 = sphi 0, %s160
    %s180 = sphi 0, %s182
    %s183 = sphi 0, %s180
    %s184 = sphi 0, %s183
    %s200 = sphi 0, %s184
  $region4: #{up_forward.1} parent=0 // loop_header_branch
    %16 = sbr.rel (%p14) target = $region8
  $region5: #{up_forward.1} parent=0 // loop_body
    %s18 = ssub.s32 %s13, 1
    %s19 = ssub.s32 %s13, 2
    %s20 = sadd.s32 %s13, 1
    %s21 = ssub.s32 %s13, %s20
    %p22 = scmp.eq.s32.totalorder %s21, 0
    %s24 = sadd.s32 %s23, 1
    %s25 = scalar_select %p22, %s23, %s24
    %p28 = pneg %p22
    %p29 = scmp.eq.s32.totalorder %s13, 1
    %p30 = por %p28, %p29
    %p31 = scmp.ne.s32.totalorder %s23, %s26
    %p32 = scmp.eq.s32.totalorder %s13, 0
    %p33 = por %p31, %p32
    %p34 = scmp.ne.s32.totalorder %s23, %s26
    %p35 = scmp.eq.s32.totalorder %s18, 1
    %p36 = por %p34, %p35
    %p37 = scmp.ne.s32.totalorder %s26, %s27
    %p38 = scmp.eq.s32.totalorder %s18, 0
    %p39 = por %p37, %p38
    %p40 = scmp.ne.s32.totalorder %s26, %s27
    %p41 = scmp.eq.s32.totalorder %s19, 1
    %p42 = por %p40, %p41
    %p44 = scmp.ne.s32.totalorder %s27, %s43
    %p45 = scmp.eq.s32.totalorder %s19, 0
    %p46 = por %p44, %p45
    %s47 = ssub.s32 %s13, %s20
    %p48 = scmp.eq.s32.totalorder %s47, 0
    %s50 = sadd.s32 %s49, 1
    %s51 = scalar_select %p48, %s49, %s50
    %p54 = pneg %p48
    %p55 = scmp.eq.s32.totalorder %s13, 1
    %p56 = por %p54, %p55
    %p57 = scmp.ne.s32.totalorder %s49, %s52
    %p58 = scmp.eq.s32.totalorder %s13, 0
    %p59 = por %p57, %p58
    %p60 = scmp.ne.s32.totalorder %s49, %s52
    %p61 = scmp.eq.s32.totalorder %s18, 1
    %p62 = por %p60, %p61
    %p63 = scmp.ne.s32.totalorder %s52, %s53
    %p64 = scmp.eq.s32.totalorder %s18, 0
    %p65 = por %p63, %p64
    %p66 = scmp.ne.s32.totalorder %s52, %s53
    %p67 = scmp.eq.s32.totalorder %s19, 1
    %p68 = por %p66, %p67
    %p70 = scmp.ne.s32.totalorder %s53, %s69
    %p71 = scmp.eq.s32.totalorder %s19, 0
    %p72 = por %p70, %p71
    %s74 = sadd.s32 %s73, 1
    %p77 = scmp.eq.s32.totalorder %s13, 1
    %p78 = scmp.ne.s32.totalorder %s73, %s75
    %p79 = scmp.eq.s32.totalorder %s13, 0
    %p80 = por %p78, %p79
    %p81 = scmp.ne.s32.totalorder %s73, %s75
    %p82 = scmp.eq.s32.totalorder %s18, 1
    %p83 = por %p81, %p82
    %p84 = scmp.ne.s32.totalorder %s75, %s76
    %p85 = scmp.eq.s32.totalorder %s18, 0
    %p86 = por %p84, %p85
    %p87 = scmp.ne.s32.totalorder %s75, %s76
    %p88 = scmp.eq.s32.totalorder %s19, 1
    %p89 = por %p87, %p88
    %p91 = scmp.ne.s32.totalorder %s76, %s90
    %p92 = scmp.eq.s32.totalorder %s19, 0
    %p93 = por %p91, %p92
    %s95 = sadd.s32 %s94, 1
    %p98 = scmp.eq.s32.totalorder %s13, 1
    %p99 = scmp.ne.s32.totalorder %s94, %s96
    %p100 = scmp.eq.s32.totalorder %s13, 0
    %p101 = por %p99, %p100
    %p102 = scmp.ne.s32.totalorder %s94, %s96
    %p103 = scmp.eq.s32.totalorder %s18, 1
    %p104 = por %p102, %p103
    %p105 = scmp.ne.s32.totalorder %s96, %s97
    %p106 = scmp.eq.s32.totalorder %s18, 0
    %p107 = por %p105, %p106
    %p108 = scmp.ne.s32.totalorder %s96, %s97
    %p109 = scmp.eq.s32.totalorder %s19, 1
    %p110 = por %p108, %p109
    %p112 = scmp.ne.s32.totalorder %s97, %s111
    %p113 = scmp.eq.s32.totalorder %s19, 0
    %p114 = por %p112, %p113
    %s116 = sadd.s32 %s115, 1
    %p119 = scmp.eq.s32.totalorder %s13, 1
    %p120 = scmp.ne.s32.totalorder %s115, %s117
    %p121 = scmp.eq.s32.totalorder %s13, 0
    %p122 = por %p120, %p121
    %p123 = scmp.ne.s32.totalorder %s115, %s117
    %p124 = scmp.eq.s32.totalorder %s18, 1
    %p125 = por %p123, %p124
    %p126 = scmp.ne.s32.totalorder %s117, %s118
    %p127 = scmp.eq.s32.totalorder %s18, 0
    %p128 = por %p126, %p127
    %p129 = scmp.ne.s32.totalorder %s117, %s118
    %p130 = scmp.eq.s32.totalorder %s19, 1
    %p131 = por %p129, %p130
    %p133 = scmp.ne.s32.totalorder %s118, %s132
    %p134 = scmp.eq.s32.totalorder %s19, 0
    %p135 = por %p133, %p134
    %s137 = sadd.s32 %s136, 1
    %p140 = scmp.eq.s32.totalorder %s13, 1
    %p141 = scmp.ne.s32.totalorder %s136, %s138
    %p142 = scmp.eq.s32.totalorder %s13, 0
    %p143 = por %p141, %p142
    %p144 = scmp.ne.s32.totalorder %s136, %s138
    %p145 = scmp.eq.s32.totalorder %s18, 1
    %p146 = por %p144, %p145
    %p147 = scmp.ne.s32.totalorder %s138, %s139
    %p148 = scmp.eq.s32.totalorder %s18, 0
    %p149 = por %p147, %p148
    %p150 = scmp.ne.s32.totalorder %s138, %s139
    %p151 = scmp.eq.s32.totalorder %s19, 1
    %p152 = por %p150, %p151
    %p154 = scmp.ne.s32.totalorder %s139, %s153
    %p155 = scmp.eq.s32.totalorder %s19, 0
    %p156 = por %p154, %p155
    %s158 = sadd.s32 %s157, 1
    %p161 = scmp.eq.s32.totalorder %s13, 1
    %p162 = scmp.ne.s32.totalorder %s157, %s159
    %p163 = scmp.eq.s32.totalorder %s13, 0
    %p164 = por %p162, %p163
    %p165 = scmp.ne.s32.totalorder %s157, %s159
    %p166 = scmp.eq.s32.totalorder %s18, 1
    %p167 = por %p165, %p166
    %p168 = scmp.ne.s32.totalorder %s159, %s160
    %p169 = scmp.eq.s32.totalorder %s18, 0
    %p170 = por %p168, %p169
    %p171 = scmp.ne.s32.totalorder %s159, %s160
    %p172 = scmp.eq.s32.totalorder %s19, 1
    %p173 = por %p171, %p172
    %p175 = scmp.ne.s32.totalorder %s160, %s174
    %p176 = scmp.eq.s32.totalorder %s19, 0
    %p177 = por %p175, %p176
    %s178 = ssub.s32 %s13, %s20
    %p179 = scmp.eq.s32.totalorder %s178, 0
    %s181 = sadd.s32 %s180, 1
    %s182 = scalar_select %p179, %s180, %s181
    %p185 = pneg %p179
    %p186 = scmp.eq.s32.totalorder %s13, 1
    %p187 = por %p185, %p186
    %p188 = scmp.ne.s32.totalorder %s180, %s183
    %p189 = scmp.eq.s32.totalorder %s13, 0
    %p190 = por %p188, %p189
    %p191 = scmp.ne.s32.totalorder %s180, %s183
    %p192 = scmp.eq.s32.totalorder %s18, 1
    %p193 = por %p191, %p192
    %p194 = scmp.ne.s32.totalorder %s183, %s184
    %p195 = scmp.eq.s32.totalorder %s18, 0
    %p196 = por %p194, %p195
    %p197 = scmp.ne.s32.totalorder %s183, %s184
    %p198 = scmp.eq.s32.totalorder %s19, 1
    %p199 = por %p197, %p198
    %p201 = scmp.ne.s32.totalorder %s184, %s200
    %p202 = scmp.eq.s32.totalorder %s19, 0
    %p203 = por %p201, %p202
    %p204 = scmp.le.s32.totalorder 1, %s13
    %p205 = scmp.lt.s32.totalorder %s13, 3
    %p206 = pnand %p204, %p205
    %p207 = pneg %p206
    // Predicated region
    $region9: #{up_forward.1} parent=5 // pred_check
      _
    $region10: #{up_forward.1} parent=5 // pred_check_branch
      %209 = sbr.rel (%p206) target = $region12
    $region11: #{up_forward.1} parent=5 // pred_region
      %s210 = ssub.s32 %s13, 1
      // Predicated region
      $region13: #{up_forward.1} parent=11 // pred_check
        %p211 = pneg %p86
      $region14: #{up_forward.1} parent=11 // pred_check_branch
        %213 = sbr.rel (%p211) target = $region16
      $region15: #{up_forward.1} parent=11 // pred_region
        _
      $region16: #{up_forward.1} parent=11 // pred_fallthru
        _
      // Predicated region
      $region17: #{up_forward.1} parent=11 // pred_check
        %p214 = pneg %p107
      $region18: #{up_forward.1} parent=11 // pred_check_branch
        %216 = sbr.rel (%p214) target = $region20
      $region19: #{up_forward.1} parent=11 // pred_region
        _
      $region20: #{up_forward.1} parent=11 // pred_fallthru
        _
      // Predicated region
      $region21: #{up_forward.1} parent=11 // pred_check
        %p217 = pneg %p128
      $region22: #{up_forward.1} parent=11 // pred_check_branch
        %219 = sbr.rel (%p217) target = $region24
      $region23: #{up_forward.1} parent=11 // pred_region
        _
      $region24: #{up_forward.1} parent=11 // pred_fallthru
        _
      // Predicated region
      $region25: #{up_forward.1} parent=11 // pred_check
        %p220 = pneg %p149
      $region26: #{up_forward.1} parent=11 // pred_check_branch
        %222 = sbr.rel (%p220) target = $region28
      $region27: #{up_forward.1} parent=11 // pred_region
        _
      $region28: #{up_forward.1} parent=11 // pred_fallthru
        _
      // Predicated region
      $region29: #{up_forward.1} parent=11 // pred_check
        %p223 = pneg %p170
      $region30: #{up_forward.1} parent=11 // pred_check_branch
        %225 = sbr.rel (%p223) target = $region32
      $region31: #{up_forward.1} parent=11 // pred_region
        _
      $region32: #{up_forward.1} parent=11 // pred_fallthru
        _
    $region12: #{up_forward.1} parent=5 // pred_fallthru
      _
    %p226 = scmp.lt.s32.totalorder %s13, 2
    // Predicated region
    $region33: #{up_forward.1} parent=5 // pred_check
      %p227 = pneg %p226
    $region34: #{up_forward.1} parent=5 // pred_check_branch
      %229 = sbr.rel (%p227) target = $region36
    $region35: #{up_forward.1} parent=5 // pred_region
      // Predicated region
      $region37: #{up_forward.1} parent=35 // pred_check
        %p230 = pneg %p33
      $region38: #{up_forward.1} parent=35 // pred_check_branch
        %232 = sbr.rel (%p230) target = $region40
      $region39: #{up_forward.1} parent=35 // pred_region
        %p233 = scmp.lt.s32.totalorder %s13, 1
        %s234 = scalar_select %p233, %s13, 1
        %s235 = smul.addr %s234, 8
        %s236 = scalar_lea.vmem %s0, %s235
      $region40: #{up_forward.1} parent=35 // pred_fallthru
        _
      // Predicated region
      $region41: #{up_forward.1} parent=35 // pred_check
        %p237 = pneg %p59
      $region42: #{up_forward.1} parent=35 // pred_check_branch
        %239 = sbr.rel (%p237) target = $region44
      $region43: #{up_forward.1} parent=35 // pred_region
        %p240 = scmp.lt.s32.totalorder %s13, 1
        %s241 = scalar_select %p240, %s13, 1
        %s242 = smul.addr %s241, 2
        %s243 = smul.addr %s242, 8
        %s244 = scalar_lea.vmem %s1, %s243
      $region44: #{up_forward.1} parent=35 // pred_fallthru
        _
    $region36: #{up_forward.1} parent=5 // pred_fallthru
      _
    %p245 = scmp.le.s32.totalorder 1, %s13
    %p246 = scmp.lt.s32.totalorder %s13, 3
    %p247 = pnand %p245, %p246
    %p248 = pneg %p247
    // Predicated region
    $region45: #{up_forward.1} parent=5 // pred_check
      _
    $region46: #{up_forward.1} parent=5 // pred_check_branch
      %250 = sbr.rel (%p247) target = $region48
    $region47: #{up_forward.1} parent=5 // pred_region
      %s251 = ssub.s32 %s13, 1
      %p252 = scmp.lt.s32.totalorder %s18, 1
      %s253 = scalar_select %p252, %s18, 1
      %s254 = smul.addr %s253, 8
      %s255 = scalar_lea.vmem %s0, %s254
      %p256 = pneg %p39
      %p257 = pneg %p36
      %p258 = scmp.lt.s32.totalorder %s18, 1
      %s259 = scalar_select %p258, %s18, 1
      %s260 = smul.addr %s259, 2
      %s261 = smul.addr %s260, 8
      %s262 = scalar_lea.vmem %s1, %s261
      %p263 = pneg %p65
      %p264 = pneg %p62
      %p265 = pneg %p86
      %p266 = pneg %p83
      %p267 = pneg %p107
      %p268 = pneg %p104
      %p269 = pneg %p128
      %p270 = pneg %p125
      %p271 = pneg %p149
      %p272 = pneg %p146
      %p273 = pneg %p170
      %p274 = pneg %p167
      %p275 = pneg %p196
      %p276 = pneg %p193
      %p277 = scmp.lt.s32.totalorder %s18, 1
      %s278 = scalar_select %p277, %s18, 1
      %s279 = smul.addr %s278, 2
      %s280 = smul.addr %s279, 8
      %s281 = scalar_lea.vmem %s7, %s280
      %p282 = scmp.lt.s32.totalorder %s18, 1
      %s283 = scalar_select %p282, %s18, 1
      %s284 = smul.addr %s283, 8
      %s285 = scalar_lea.vmem %s0, %s284
      %p286 = scmp.lt.s32.totalorder %s18, 1
      %s287 = scalar_select %p286, %s18, 1
      %s288 = smul.addr %s287, 2
      %s289 = smul.addr %s288, 8
      %s290 = scalar_lea.vmem %s1, %s289
      %p291 = scmp.lt.s32.totalorder %s18, 1
      %s292 = scalar_select %p291, %s18, 1
      %s293 = smul.addr %s292, 2
      %s294 = smul.addr %s293, 8
      %s295 = scalar_lea.vmem %s7, %s294
      %296 = vst [vmem:[#allocation2] sm:$0xff] 0.0
      %297 = vst [vmem:[#allocation2 + $0x8] sm:$0xff] 0.0
      %298 = vst [vmem:[#allocation2 + $0x10] sm:$0xff] 0.0
      %299 = vst [vmem:[#allocation2 + $0x18] sm:$0xff] 0.0
      %300 = vst [vmem:[#allocation2 + $0x20] sm:$0x3] 0.0
      %301 = vst [vmem:[#allocation2 + $0x28] sm:$0x3] 0.0
      %302 = vst [vmem:[#allocation3] sm:$0xff] 0.0
      %303 = vst [vmem:[#allocation3 + $0x8] sm:$0xff] 0.0
      %304 = vst [vmem:[#allocation3 + $0x10] sm:$0x3] 0.0
      %v305 = vld [vmem:[%s2] sm:$0xff]
      %v306 = vld [vmem:[%s2 + $0x8] sm:$0xff]
      %v307 = vld [vmem:[%s285] sm:$0xff]
      %vm308 = vcmask 64512
      %v310 = vsel %vm308, %v305, 0
      %v313 = vsel %vm308, %v306, 0
      %315 = vmatpush.msra.mxu0 0.0
      %316 = vmatpush.msra.mxu0 0.0
      %317 = vmatpush.msra.mxu0 0.0
      %318 = vmatpush.msra.mxu0 0.0
      %319 = vmatpush.msra.mxu0 0.0
      %320 = vmatpush.msra.mxu0 0.0
      %321 = vmatpush.msra.mxu0 0.0
      %322 = vmatpush.msra.mxu0 0.0
      %323 = vmatpush.msra.mxu0 0.0
      %324 = vmatpush.msra.mxu0 0.0
      %325 = vmatpush.msra.mxu0 0.0
      %326 = vmatpush.msra.mxu0 0.0
      %327 = vmatpush.msra.mxu0 0.0
      %328 = vmatpush.msra.mxu0 0.0
      %329 = vmatpush.msra.mxu0 0.0
      %330 = vmatpush.msra.mxu0 %v307
      %331 = vmatmul.f32.gmra.mxu0 %v310
      %v332 = vpop.f32.mrf.mxu0
      %v333 = vadd.f32 0.0, %v332
      %334 = vmatmul.f32.gmra.mxu0 %v313
      %v335 = vpop.f32.mrf.mxu0
      %v336 = vadd.f32 0.0, %v335
      %337 = vdwg.mxu0
      %v338 = vld [vmem:[%s290] sm:$0xff]
      %v339 = vld [vmem:[%s290 + $0x8] sm:$0xff]
      %vm342 = vcmask 1040384
      %v343 = vrot.slane %v338, 7
      %v344 = vrot.slane %v339, 7
      %v345 = vsel %vm342, %v343, %v344
      %346 = vrot.lane.b32.xlu0 %v343, 4
      %v347 = vpop.permute.xlu0 %346
      %348 = vrot.lane.b32.xlu0 %v345, 4
      %v349 = vpop.permute.xlu0 %348
      %350 = vrot.lane.b32.xlu0 %v344, 4
      %v351 = vpop.permute.xlu0 %350
      %vm355 = vcmask 556065
      %356 = vst.msk [vmem:[#allocation2] sm:$0xfe] %vm355, %v347
      %vm357 = vcmask 556064
      %358 = vst.msk [vmem:[#allocation2 + $0x10] sm:$0xff] %vm357, %v349
      %vm359 = vcmask 548896
      %360 = vst.msk [vmem:[#allocation2 + $0x20] sm:$0x1] %vm359, %v351
      %v363 = vrot.slane %v333, 7
      %v364 = vrot.slane %v336, 7
      %v365 = vsel %vm342, %v363, %v364
      %vm369 = vcmask 261121
      %370 = vst.msk [vmem:[#allocation2 + $0x8] sm:$0xfe] %vm369, %v363
      %vm371 = vcmask 261120
      %372 = vst.msk [vmem:[#allocation2 + $0x18] sm:$0xff] %vm371, %v365
      %vm373 = vcmask 253952
      %374 = vst.msk [vmem:[#allocation2 + $0x28] sm:$0x1] %vm373, %v364
      %v375 = vld [vmem:[#allocation2] sm:$0xff]
      %v376 = vld [vmem:[#allocation2 + $0x8] sm:$0xff]
      %v377 = vld [vmem:[#allocation2 + $0x10] sm:$0xff]
      %v378 = vld [vmem:[#allocation2 + $0x18] sm:$0xff]
      %v379 = vld [vmem:[%s3] sm:$0xff]
      %v380 = vld [vmem:[%s3 + $0x8] sm:$0xff]
      %v381 = vld [vmem:[%s3 + $0x10] sm:$0xff]
      %v382 = vld [vmem:[%s3 + $0x18] sm:$0xff]
      %v383 = vld [vmem:[%s3 + $0x20] sm:$0xff]
      %v384 = vld [vmem:[%s3 + $0x28] sm:$0xff]
      %v385 = vld [vmem:[%s3 + $0x30] sm:$0xff]
      %v386 = vld [vmem:[%s3 + $0x38] sm:$0xff]
      %v387 = vld [vmem:[%s3 + $0x40] sm:$0xff]
      %v388 = vld [vmem:[%s3 + $0x48] sm:$0xff]
      %v389 = vld [vmem:[%s3 + $0x50] sm:$0xff]
      %v390 = vld [vmem:[%s3 + $0x58] sm:$0xff]
      %v391 = vld [vmem:[%s3 + $0x60] sm:$0xff]
      %v392 = vld [vmem:[%s3 + $0x68] sm:$0xff]
      %v393 = vld [vmem:[%s3 + $0x70] sm:$0xff]
      %v394 = vld [vmem:[%s3 + $0x78] sm:$0xff]
      %v395 = vld [vmem:[%s3 + $0x80] sm:$0xff]
      %v396 = vld [vmem:[%s3 + $0x88] sm:$0xff]
      %v397 = vld [vmem:[%s3 + $0x90] sm:$0xff]
      %v398 = vld [vmem:[%s3 + $0x98] sm:$0xff]
      %v399 = vld [vmem:[%s3 + $0xa0] sm:$0xff]
      %v400 = vld [vmem:[%s3 + $0xa8] sm:$0xff]
      %v401 = vld [vmem:[%s3 + $0xb0] sm:$0xff]
      %v402 = vld [vmem:[%s3 + $0xb8] sm:$0xff]
      %v403 = vld [vmem:[%s3 + $0xc0] sm:$0xff]
      %v404 = vld [vmem:[%s3 + $0xc8] sm:$0xff]
      %v405 = vld [vmem:[%s3 + $0xd0] sm:$0xff]
      %v406 = vld [vmem:[%s3 + $0xd8] sm:$0xff]
      %v407 = vld [vmem:[%s3 + $0xe0] sm:$0xff]
      %v408 = vld [vmem:[%s3 + $0xe8] sm:$0xff]
      %v409 = vld [vmem:[%s3 + $0xf0] sm:$0xff]
      %v410 = vld [vmem:[%s3 + $0xf8] sm:$0xff]
      %v411 = vld [vmem:[#allocation2] sm:$0xfe]
      %v412 = vld [vmem:[#allocation2 + $0x8] sm:$0xfe]
      %v413 = vld [vmem:[#allocation2 + $0x20] sm:$0x1]
      %v414 = vld [vmem:[#allocation2 + $0x28] sm:$0x1]
      %s415 = scalar_lea.vmem %s3, 256
      %v416 = vld [vmem:[%s415] sm:$0xff]
      %v417 = vld [vmem:[%s415 + $0x8] sm:$0xff]
      %v418 = vld [vmem:[%s415 + $0x10] sm:$0xff]
      %v419 = vld [vmem:[%s415 + $0x18] sm:$0xff]
      %v420 = vld [vmem:[%s415 + $0x20] sm:$0xff]
      %v421 = vld [vmem:[%s415 + $0x28] sm:$0xff]
      %v422 = vld [vmem:[%s415 + $0x30] sm:$0xff]
      %v423 = vld [vmem:[%s415 + $0x38] sm:$0xff]
      %v424 = vld [vmem:[%s415 + $0x40] sm:$0xff]
      %v425 = vld [vmem:[%s415 + $0x48] sm:$0xff]
      %v426 = vld [vmem:[%s415 + $0x50] sm:$0xff]
      %v427 = vld [vmem:[%s415 + $0x58] sm:$0xff]
      %v428 = vld [vmem:[%s415 + $0x60] sm:$0xff]
      %v429 = vld [vmem:[%s415 + $0x68] sm:$0xff]
      %v430 = vld [vmem:[%s415 + $0x70] sm:$0xff]
      %v431 = vld [vmem:[%s415 + $0x78] sm:$0xff]
      %v432 = vld [vmem:[%s415 + $0x80] sm:$0xff]
      %v433 = vld [vmem:[%s415 + $0x88] sm:$0xff]
      %v434 = vld [vmem:[%s415 + $0x90] sm:$0xff]
      %v435 = vld [vmem:[%s415 + $0x98] sm:$0xff]
      %v436 = vld [vmem:[%s415 + $0xa0] sm:$0xff]
      %v437 = vld [vmem:[%s415 + $0xa8] sm:$0xff]
      %v438 = vld [vmem:[%s415 + $0xb0] sm:$0xff]
      %v439 = vld [vmem:[%s415 + $0xb8] sm:$0xff]
      %v440 = vld [vmem:[%s415 + $0xc0] sm:$0xff]
      %v441 = vld [vmem:[%s415 + $0xc8] sm:$0xff]
      %v442 = vld [vmem:[%s415 + $0xd0] sm:$0xff]
      %v443 = vld [vmem:[%s415 + $0xd8] sm:$0xff]
      %v444 = vld [vmem:[%s415 + $0xe0] sm:$0xff]
      %v445 = vld [vmem:[%s415 + $0xe8] sm:$0xff]
      %v446 = vld [vmem:[%s415 + $0xf0] sm:$0xff]
      %v447 = vld [vmem:[%s415 + $0xf8] sm:$0xff]
      %vm454 = vcmask 1046528
      %v455 = vrot.slane %v411, 1
      %v456 = vrot.slane %v377, 1
      %v457 = vsel %vm454, %v455, %v456
      %v458 = vrot.slane %v412, 1
      %v459 = vrot.slane %v378, 1
      %v460 = vsel %vm454, %v458, %v459
      %v461 = vrot.slane %v413, 1
      %v462 = vsel %vm454, %v456, %v461
      %v463 = vrot.slane %v414, 1
      %v464 = vsel %vm454, %v459, %v463
      %469 = vmatpush.msra.mxu0 %v431
      %470 = vmatpush.msra.mxu0 %v430
      %471 = vmatpush.msra.mxu0 %v429
      %472 = vmatpush.msra.mxu0 %v428
      %473 = vmatpush.msra.mxu0 %v427
      %474 = vmatpush.msra.mxu0 %v426
      %475 = vmatpush.msra.mxu0 %v425
      %476 = vmatpush.msra.mxu0 %v424
      %477 = vmatpush.msra.mxu0 %v423
      %478 = vmatpush.msra.mxu0 %v422
      %479 = vmatpush.msra.mxu0 %v421
      %480 = vmatpush.msra.mxu0 %v420
      %481 = vmatpush.msra.mxu0 %v419
      %482 = vmatpush.msra.mxu0 %v418
      %483 = vmatpush.msra.mxu0 %v417
      %484 = vmatpush.msra.mxu0 %v416
      %485 = vmatmul.f32.gmra.mxu0 %v457
      %v486 = vpop.f32.mrf.mxu0
      %v487 = vadd.f32 0.0, %v486
      %488 = vmatmul.f32.gmra.mxu0 %v462
      %v489 = vpop.f32.mrf.mxu0
      %v490 = vadd.f32 0.0, %v489
      %491 = vdwg.mxu0
      %492 = vmatpush.msra.mxu0 %v447
      %493 = vmatpush.msra.mxu0 %v446
      %494 = vmatpush.msra.mxu0 %v445
      %495 = vmatpush.msra.mxu0 %v444
      %496 = vmatpush.msra.mxu0 %v443
      %497 = vmatpush.msra.mxu0 %v442
      %498 = vmatpush.msra.mxu0 %v441
      %499 = vmatpush.msra.mxu0 %v440
      %500 = vmatpush.msra.mxu0 %v439
      %501 = vmatpush.msra.mxu0 %v438
      %502 = vmatpush.msra.mxu0 %v437
      %503 = vmatpush.msra.mxu0 %v436
      %504 = vmatpush.msra.mxu0 %v435
      %505 = vmatpush.msra.mxu0 %v434
      %506 = vmatpush.msra.mxu0 %v433
      %507 = vmatpush.msra.mxu0 %v432
      %508 = vmatmul.f32.gmra.mxu0 %v460
      %v509 = vpop.f32.mrf.mxu0
      %v510 = vadd.f32 %v487, %v509
      %511 = vmatmul.f32.gmra.mxu0 %v464
      %v512 = vpop.f32.mrf.mxu0
      %v513 = vadd.f32 %v490, %v512
      %514 = vdwg.mxu0
      %515 = vmatpush.msra.mxu0 %v394
      %516 = vmatpush.msra.mxu0 %v393
      %517 = vmatpush.msra.mxu0 %v392
      %518 = vmatpush.msra.mxu0 %v391
      %519 = vmatpush.msra.mxu0 %v390
      %520 = vmatpush.msra.mxu0 %v389
      %521 = vmatpush.msra.mxu0 %v388
      %522 = vmatpush.msra.mxu0 %v387
      %523 = vmatpush.msra.mxu0 %v386
      %524 = vmatpush.msra.mxu0 %v385
      %525 = vmatpush.msra.mxu0 %v384
      %526 = vmatpush.msra.mxu0 %v383
      %527 = vmatpush.msra.mxu0 %v382
      %528 = vmatpush.msra.mxu0 %v381
      %529 = vmatpush.msra.mxu0 %v380
      %530 = vmatpush.msra.mxu0 %v379
      %531 = vmatmul.f32.gmra.mxu0 %v375
      %v532 = vpop.f32.mrf.mxu0
      %v533 = vadd.f32 %v510, %v532
      %534 = vmatmul.f32.gmra.mxu0 %v377
      %v535 = vpop.f32.mrf.mxu0
      %v536 = vadd.f32 %v513, %v535
      %537 = vdwg.mxu0
      %538 = vmatpush.msra.mxu0 %v410
      %539 = vmatpush.msra.mxu0 %v409
      %540 = vmatpush.msra.mxu0 %v408
      %541 = vmatpush.msra.mxu0 %v407
      %542 = vmatpush.msra.mxu0 %v406
      %543 = vmatpush.msra.mxu0 %v405
      %544 = vmatpush.msra.mxu0 %v404
      %545 = vmatpush.msra.mxu0 %v403
      %546 = vmatpush.msra.mxu0 %v402
      %547 = vmatpush.msra.mxu0 %v401
      %548 = vmatpush.msra.mxu0 %v400
      %549 = vmatpush.msra.mxu0 %v399
      %550 = vmatpush.msra.mxu0 %v398
      %551 = vmatpush.msra.mxu0 %v397
      %552 = vmatpush.msra.mxu0 %v396
      %553 = vmatpush.msra.mxu0 %v395
      %554 = vmatmul.f32.gmra.mxu0 %v376
      %v555 = vpop.f32.mrf.mxu0
      %v556 = vadd.f32 %v533, %v555
      %557 = vmatmul.f32.gmra.mxu0 %v378
      %v558 = vpop.f32.mrf.mxu0
      %v559 = vadd.f32 %v536, %v558
      %560 = vdwg.mxu0
      %v561 = vld [vmem:[#allocation2] sm:$0xfc]
      %v562 = vld [vmem:[#allocation2 + $0x8] sm:$0xfc]
      %v563 = vld [vmem:[#allocation2 + $0x20] sm:$0x3]
      %v564 = vld [vmem:[#allocation2 + $0x28] sm:$0x3]
      %s565 = scalar_lea.vmem %s3, 512
      %v566 = vld [vmem:[%s565] sm:$0xff]
      %v567 = vld [vmem:[%s565 + $0x8] sm:$0xff]
      %v568 = vld [vmem:[%s565 + $0x10] sm:$0xff]
      %v569 = vld [vmem:[%s565 + $0x18] sm:$0xff]
      %v570 = vld [vmem:[%s565 + $0x20] sm:$0xff]
      %v571 = vld [vmem:[%s565 + $0x28] sm:$0xff]
      %v572 = vld [vmem:[%s565 + $0x30] sm:$0xff]
      %v573 = vld [vmem:[%s565 + $0x38] sm:$0xff]
      %v574 = vld [vmem:[%s565 + $0x40] sm:$0xff]
      %v575 = vld [vmem:[%s565 + $0x48] sm:$0xff]
      %v576 = vld [vmem:[%s565 + $0x50] sm:$0xff]
      %v577 = vld [vmem:[%s565 + $0x58] sm:$0xff]
      %v578 = vld [vmem:[%s565 + $0x60] sm:$0xff]
      %v579 = vld [vmem:[%s565 + $0x68] sm:$0xff]
      %v580 = vld [vmem:[%s565 + $0x70] sm:$0xff]
      %v581 = vld [vmem:[%s565 + $0x78] sm:$0xff]
      %v582 = vld [vmem:[%s565 + $0x80] sm:$0xff]
      %v583 = vld [vmem:[%s565 + $0x88] sm:$0xff]
      %v584 = vld [vmem:[%s565 + $0x90] sm:$0xff]
      %v585 = vld [vmem:[%s565 + $0x98] sm:$0xff]
      %v586 = vld [vmem:[%s565 + $0xa0] sm:$0xff]
      %v587 = vld [vmem:[%s565 + $0xa8] sm:$0xff]
      %v588 = vld [vmem:[%s565 + $0xb0] sm:$0xff]
      %v589 = vld [vmem:[%s565 + $0xb8] sm:$0xff]
      %v590 = vld [vmem:[%s565 + $0xc0] sm:$0xff]
      %v591 = vld [vmem:[%s565 + $0xc8] sm:$0xff]
      %v592 = vld [vmem:[%s565 + $0xd0] sm:$0xff]
      %v593 = vld [vmem:[%s565 + $0xd8] sm:$0xff]
      %v594 = vld [vmem:[%s565 + $0xe0] sm:$0xff]
      %v595 = vld [vmem:[%s565 + $0xe8] sm:$0xff]
      %v596 = vld [vmem:[%s565 + $0xf0] sm:$0xff]
      %v597 = vld [vmem:[%s565 + $0xf8] sm:$0xff]
      %vm602 = vcmask 1045504
      %v603 = vrot.slane %v561, 2
      %v604 = vrot.slane %v377, 2
      %v605 = vsel %vm602, %v603, %v604
      %v606 = vrot.slane %v562, 2
      %v607 = vrot.slane %v378, 2
      %v608 = vsel %vm602, %v606, %v607
      %v609 = vrot.slane %v563, 2
      %v610 = vsel %vm602, %v604, %v609
      %v611 = vrot.slane %v564, 2
      %v612 = vsel %vm602, %v607, %v611
      %617 = vmatpush.msra.mxu0 %v581
      %618 = vmatpush.msra.mxu0 %v580
      %619 = vmatpush.msra.mxu0 %v579
      %620 = vmatpush.msra.mxu0 %v578
      %621 = vmatpush.msra.mxu0 %v577
      %622 = vmatpush.msra.mxu0 %v576
      %623 = vmatpush.msra.mxu0 %v575
      %624 = vmatpush.msra.mxu0 %v574
      %625 = vmatpush.msra.mxu0 %v573
      %626 = vmatpush.msra.mxu0 %v572
      %627 = vmatpush.msra.mxu0 %v571
      %628 = vmatpush.msra.mxu0 %v570
      %629 = vmatpush.msra.mxu0 %v569
      %630 = vmatpush.msra.mxu0 %v568
      %631 = vmatpush.msra.mxu0 %v567
      %632 = vmatpush.msra.mxu0 %v566
      %633 = vmatmul.f32.gmra.mxu0 %v605
      %v634 = vpop.f32.mrf.mxu0
      %v635 = vadd.f32 0.0, %v634
      %636 = vmatmul.f32.gmra.mxu0 %v610
      %v637 = vpop.f32.mrf.mxu0
      %v638 = vadd.f32 0.0, %v637
      %639 = vdwg.mxu0
      %640 = vmatpush.msra.mxu0 %v597
      %641 = vmatpush.msra.mxu0 %v596
      %642 = vmatpush.msra.mxu0 %v595
      %643 = vmatpush.msra.mxu0 %v594
      %644 = vmatpush.msra.mxu0 %v593
      %645 = vmatpush.msra.mxu0 %v592
      %646 = vmatpush.msra.mxu0 %v591
      %647 = vmatpush.msra.mxu0 %v590
      %648 = vmatpush.msra.mxu0 %v589
      %649 = vmatpush.msra.mxu0 %v588
      %650 = vmatpush.msra.mxu0 %v587
      %651 = vmatpush.msra.mxu0 %v586
      %652 = vmatpush.msra.mxu0 %v585
      %653 = vmatpush.msra.mxu0 %v584
      %654 = vmatpush.msra.mxu0 %v583
      %655 = vmatpush.msra.mxu0 %v582
      %656 = vmatmul.f32.gmra.mxu0 %v608
      %v657 = vpop.f32.mrf.mxu0
      %v658 = vadd.f32 %v635, %v657
      %659 = vmatmul.f32.gmra.mxu0 %v612
      %v660 = vpop.f32.mrf.mxu0
      %v661 = vadd.f32 %v638, %v660
      %662 = vdwg.mxu0
      %v663 = vadd.f32 %v556, %v658
      %v664 = vadd.f32 %v559, %v661
      %v665 = vld [vmem:[%s5] sm:$0x1]
      %v667 = vperm.slane %v665, 0
      %v669 = vadd.f32 %v663, %v667
      %v670 = vadd.f32 %v664, %v667
      %v671 = vmax.f32 %v669, 0.0
      %v672 = vmax.f32 %v670, 0.0
      %675 = vrot.lane.b32.xlu0 %v671, 4
      %v676 = vpop.permute.xlu0 %675
      %677 = vrot.lane.b32.xlu0 %v672, 4
      %v678 = vpop.permute.xlu0 %677
      %681 = vst.msk [vmem:[#allocation3 + $0x1] sm:$0xff] %vm357, %v676
      %682 = vst.msk [vmem:[#allocation3 + $0x9] sm:$0xff] %vm357, %v678
      %v683 = vld [vmem:[#allocation3] sm:$0xff]
      %v684 = vld [vmem:[#allocation3 + $0x8] sm:$0xff]
      %v685 = vld [vmem:[%s4] sm:$0xff]
      %v686 = vld [vmem:[%s4 + $0x8] sm:$0xff]
      %v687 = vld [vmem:[%s4 + $0x10] sm:$0xff]
      %v688 = vld [vmem:[%s4 + $0x18] sm:$0xff]
      %v689 = vld [vmem:[%s4 + $0x20] sm:$0xff]
      %v690 = vld [vmem:[%s4 + $0x28] sm:$0xff]
      %v691 = vld [vmem:[%s4 + $0x30] sm:$0xff]
      %v692 = vld [vmem:[%s4 + $0x38] sm:$0xff]
      %v693 = vld [vmem:[%s4 + $0x40] sm:$0xff]
      %v694 = vld [vmem:[%s4 + $0x48] sm:$0xff]
      %v695 = vld [vmem:[%s4 + $0x50] sm:$0xff]
      %v696 = vld [vmem:[%s4 + $0x58] sm:$0xff]
      %v697 = vld [vmem:[%s4 + $0x60] sm:$0xff]
      %v698 = vld [vmem:[%s4 + $0x68] sm:$0xff]
      %v699 = vld [vmem:[%s4 + $0x70] sm:$0xff]
      %v700 = vld [vmem:[%s4 + $0x78] sm:$0xff]
      %v701 = vld [vmem:[#allocation3 + $0x1] sm:$0xff]
      %v702 = vld [vmem:[#allocation3 + $0x9] sm:$0xff]
      %s703 = scalar_lea.vmem %s4, 128
      %v704 = vld [vmem:[%s703] sm:$0xff]
      %v705 = vld [vmem:[%s703 + $0x8] sm:$0xff]
      %v706 = vld [vmem:[%s703 + $0x10] sm:$0xff]
      %v707 = vld [vmem:[%s703 + $0x18] sm:$0xff]
      %v708 = vld [vmem:[%s703 + $0x20] sm:$0xff]
      %v709 = vld [vmem:[%s703 + $0x28] sm:$0xff]
      %v710 = vld [vmem:[%s703 + $0x30] sm:$0xff]
      %v711 = vld [vmem:[%s703 + $0x38] sm:$0xff]
      %v712 = vld [vmem:[%s703 + $0x40] sm:$0xff]
      %v713 = vld [vmem:[%s703 + $0x48] sm:$0xff]
      %v714 = vld [vmem:[%s703 + $0x50] sm:$0xff]
      %v715 = vld [vmem:[%s703 + $0x58] sm:$0xff]
      %v716 = vld [vmem:[%s703 + $0x60] sm:$0xff]
      %v717 = vld [vmem:[%s703 + $0x68] sm:$0xff]
      %v718 = vld [vmem:[%s703 + $0x70] sm:$0xff]
      %v719 = vld [vmem:[%s703 + $0x78] sm:$0xff]
      %720 = vmatpush.msra.mxu0 %v719
      %721 = vmatpush.msra.mxu0 %v718
      %722 = vmatpush.msra.mxu0 %v717
      %723 = vmatpush.msra.mxu0 %v716
      %724 = vmatpush.msra.mxu0 %v715
      %725 = vmatpush.msra.mxu0 %v714
      %726 = vmatpush.msra.mxu0 %v713
      %727 = vmatpush.msra.mxu0 %v712
      %728 = vmatpush.msra.mxu0 %v711
      %729 = vmatpush.msra.mxu0 %v710
      %730 = vmatpush.msra.mxu0 %v709
      %731 = vmatpush.msra.mxu0 %v708
      %732 = vmatpush.msra.mxu0 %v707
      %733 = vmatpush.msra.mxu0 %v706
      %734 = vmatpush.msra.mxu0 %v705
      %735 = vmatpush.msra.mxu0 %v704
      %736 = vmatmul.f32.gmra.mxu0 %v701
      %v737 = vpop.f32.mrf.mxu0
      %v738 = vadd.f32 0.0, %v737
      %739 = vmatmul.f32.gmra.mxu0 %v702
      %v740 = vpop.f32.mrf.mxu0
      %v741 = vadd.f32 0.0, %v740
      %742 = vdwg.mxu0
      %743 = vmatpush.msra.mxu0 %v700
      %744 = vmatpush.msra.mxu0 %v699
      %745 = vmatpush.msra.mxu0 %v698
      %746 = vmatpush.msra.mxu0 %v697
      %747 = vmatpush.msra.mxu0 %v696
      %748 = vmatpush.msra.mxu0 %v695
      %749 = vmatpush.msra.mxu0 %v694
      %750 = vmatpush.msra.mxu0 %v693
      %751 = vmatpush.msra.mxu0 %v692
      %752 = vmatpush.msra.mxu0 %v691
      %753 = vmatpush.msra.mxu0 %v690
      %754 = vmatpush.msra.mxu0 %v689
      %755 = vmatpush.msra.mxu0 %v688
      %756 = vmatpush.msra.mxu0 %v687
      %757 = vmatpush.msra.mxu0 %v686
      %758 = vmatpush.msra.mxu0 %v685
      %759 = vmatmul.f32.gmra.mxu0 %v683
      %v760 = vpop.f32.mrf.mxu0
      %v761 = vadd.f32 %v738, %v760
      %762 = vmatmul.f32.gmra.mxu0 %v684
      %v763 = vpop.f32.mrf.mxu0
      %v764 = vadd.f32 %v741, %v763
      %765 = vdwg.mxu0
      %v766 = vld [vmem:[#allocation3 + $0x2] sm:$0xff]
      %v767 = vld [vmem:[#allocation3 + $0xa] sm:$0xff]
      %s768 = scalar_lea.vmem %s4, 256
      %v769 = vld [vmem:[%s768] sm:$0xff]
      %v770 = vld [vmem:[%s768 + $0x8] sm:$0xff]
      %v771 = vld [vmem:[%s768 + $0x10] sm:$0xff]
      %v772 = vld [vmem:[%s768 + $0x18] sm:$0xff]
      %v773 = vld [vmem:[%s768 + $0x20] sm:$0xff]
      %v774 = vld [vmem:[%s768 + $0x28] sm:$0xff]
      %v775 = vld [vmem:[%s768 + $0x30] sm:$0xff]
      %v776 = vld [vmem:[%s768 + $0x38] sm:$0xff]
      %v777 = vld [vmem:[%s768 + $0x40] sm:$0xff]
      %v778 = vld [vmem:[%s768 + $0x48] sm:$0xff]
      %v779 = vld [vmem:[%s768 + $0x50] sm:$0xff]
      %v780 = vld [vmem:[%s768 + $0x58] sm:$0xff]
      %v781 = vld [vmem:[%s768 + $0x60] sm:$0xff]
      %v782 = vld [vmem:[%s768 + $0x68] sm:$0xff]
      %v783 = vld [vmem:[%s768 + $0x70] sm:$0xff]
      %v784 = vld [vmem:[%s768 + $0x78] sm:$0xff]
      %785 = vmatpush.msra.mxu0 %v784
      %786 = vmatpush.msra.mxu0 %v783
      %787 = vmatpush.msra.mxu0 %v782
      %788 = vmatpush.msra.mxu0 %v781
      %789 = vmatpush.msra.mxu0 %v780
      %790 = vmatpush.msra.mxu0 %v779
      %791 = vmatpush.msra.mxu0 %v778
      %792 = vmatpush.msra.mxu0 %v777
      %793 = vmatpush.msra.mxu0 %v776
      %794 = vmatpush.msra.mxu0 %v775
      %795 = vmatpush.msra.mxu0 %v774
      %796 = vmatpush.msra.mxu0 %v773
      %797 = vmatpush.msra.mxu0 %v772
      %798 = vmatpush.msra.mxu0 %v771
      %799 = vmatpush.msra.mxu0 %v770
      %800 = vmatpush.msra.mxu0 %v769
      %801 = vmatmul.f32.gmra.mxu0 %v766
      %v802 = vpop.f32.mrf.mxu0
      %v803 = vadd.f32 0.0, %v802
      %804 = vmatmul.f32.gmra.mxu0 %v767
      %v805 = vpop.f32.mrf.mxu0
      %v806 = vadd.f32 0.0, %v805
      %807 = vdwg.mxu0
      %v808 = vadd.f32 %v761, %v803
      %v809 = vadd.f32 %v764, %v806
      %v810 = vld [vmem:[%s6] sm:$0x1]
      %v812 = vperm.slane %v810, 0
      %v814 = vadd.f32 %v808, %v812
      %v815 = vadd.f32 %v809, %v812
      %v816 = vmax.f32 %v814, 0.0
      %v817 = vmax.f32 %v815, 0.0
      %818 = vst [vmem:[%s295] sm:$0xff] %v816
      %819 = vst [vmem:[%s295 + $0x8] sm:$0xff] %v817
      %p820 = scmp.lt.s32.totalorder %s18, 1
      %s821 = scalar_select %p820, %s18, 1
      %s822 = smul.addr %s821, 2
      %s823 = smul.addr %s822, 8
      %s824 = scalar_lea.vmem %s7, %s823
      // Predicated region
      $region49: #{up_forward.1} parent=47 // pred_check
        %p825 = pneg %p193
      $region50: #{up_forward.1} parent=47 // pred_check_branch
        %827 = sbr.rel (%p825) target = $region52
      $region51: #{up_forward.1} parent=47 // pred_region
        _
      $region52: #{up_forward.1} parent=47 // pred_fallthru
        _
    $region48: #{up_forward.1} parent=5 // pred_fallthru
      _
    %p828 = scmp.le.s32.totalorder 2, %s13
    // Predicated region
    $region53: #{up_forward.1} parent=5 // pred_check
      %p829 = pneg %p828
    $region54: #{up_forward.1} parent=5 // pred_check_branch
      %831 = sbr.rel (%p829) target = $region56
    $region55: #{up_forward.1} parent=5 // pred_region
      %s832 = ssub.s32 %s13, 2
      // Predicated region
      $region57: #{up_forward.1} parent=55 // pred_check
        %p833 = pneg %p199
      $region58: #{up_forward.1} parent=55 // pred_check_branch
        %835 = sbr.rel (%p833) target = $region60
      $region59: #{up_forward.1} parent=55 // pred_region
        %p836 = scmp.lt.s32.totalorder %s19, 1
        %s837 = scalar_select %p836, %s19, 1
        %s838 = smul.addr %s837, 2
        %s839 = smul.addr %s838, 8
        %s840 = scalar_lea.vmem %s7, %s839
      $region60: #{up_forward.1} parent=55 // pred_fallthru
        _
    $region56: #{up_forward.1} parent=5 // pred_fallthru
      _
  $region6: #{up_forward.1} parent=0 // loop_footer
    %s17 = sadd.s32 1, %s13
  $region7: #{up_forward.1} parent=0 // loop_footer_branch
    %12 = sbr.rel target = $region3
  $region8: #{up_forward.1} parent=0 // loop_exit
    _

</llo_original>
